<compile_context>
chip_gen: v5e
topology: v5e:2x2
jax: 0.10.0
libtpu: 0.0.40
codegen_flags: <defaults>
</compile_context>

<pallas_src>
import math
import jax
import jax.numpy as jnp
from jax.experimental import pallas as pl
from jax.experimental.pallas import tpu as pltpu


def _leaky_relu(x, slope=0.01):
    return jnp.where(x > 0, x, slope * x)


def _round_up(n, m):
    return ((n + m - 1) // m) * m


def mlp_kernel(x_ref, w1_ref, b1_ref, w2_ref, b2_ref, w3_ref, b3_ref, out_ref):
    # x arrives as f32 straight from HBM; cast to bf16 in-kernel (free VALU slot).
    # Weights are pre-cast bf16; biases / accumulation / elementwise stay f32.
    x = x_ref[...].astype(jnp.bfloat16)

    h1 = jnp.dot(x, w1_ref[...], preferred_element_type=jnp.float32) + b1_ref[...]
    h1 = _leaky_relu(h1)

    h2 = jnp.dot(h1.astype(jnp.bfloat16), w2_ref[...],
                 preferred_element_type=jnp.float32) + b2_ref[...]
    h2 = _leaky_relu(h2)

    out = jnp.dot(h2.astype(jnp.bfloat16), w3_ref[...],
                  preferred_element_type=jnp.float32) + b3_ref[...]
    out_ref[...] = out.astype(out_ref.dtype)


def _choose_tile(batch, block_batch):
    """Batch-tile size: single full-dim tile for small batches; otherwise a multiple
    of 8 rows, capped so the grid has at least 2 steps (v7x megacore) and at most
    block_batch rows per step."""
    if batch <= 128:
        return batch                       # full-dim block: no sublane-multiple needed
    half = _round_up(pl.cdiv(batch, 2), 8)  # >= 2 tiles when the batch is large
    return min(block_batch, half)


def prepare_params(params):
    """One-time prep outside the per-call path: cast weights to bf16 (MXU-native)."""
    w1, b1, w2, b2, w3, b3 = params
    bf = jnp.bfloat16
    return (w1.astype(bf), b1, w2.astype(bf), b2, w3.astype(bf), b3)


def dqn_mlp_forward(x, prepared_params, *, block_batch=2048):
    """x: (batch, dim_obs) f32 -> (batch, dim_action) f32."""
    w1, b1, w2, b2, w3, b3 = prepared_params
    batch, dim_obs = x.shape
    dim_action = w3.shape[1]

    tb = _choose_tile(batch, block_batch)
    grid = (pl.cdiv(batch, tb),)           # ragged last tile handled by Pallas clipping
    const2 = lambda i: (0, 0)              # weights/biases: same block every step

    out = pl.pallas_call(
        mlp_kernel,
        out_shape=jax.ShapeDtypeStruct((batch, dim_action), jnp.float32),
        grid=grid,
        in_specs=[
            pl.BlockSpec((tb, dim_obs), lambda i: (i, 0)),
            pl.BlockSpec(w1.shape, const2),
            pl.BlockSpec(b1.shape, const2),
            pl.BlockSpec(w2.shape, const2),
            pl.BlockSpec(b2.shape, const2),
            pl.BlockSpec(w3.shape, const2),
            pl.BlockSpec(b3.shape, const2),
        ],
        out_specs=pl.BlockSpec((tb, dim_action), lambda i: (i, 0)),
        compiler_params=pltpu.CompilerParams(dimension_semantics=("parallel",)),
    )(x, w1, b1, w2, b2, w3, b3)

    return out


# ----------------------------- init / references -----------------------------

def xavier_uniform(key, fan_in, fan_out, gain):
    bound = gain * math.sqrt(6.0 / (fan_in + fan_out))
    # stored as (in, out): y = x @ W
    return jax.random.uniform(key, (fan_in, fan_out), jnp.float32, -bound, bound)


def linear_bias(key, fan_in, fan_out):
    # PyTorch nn.Linear default bias init: U(-1/sqrt(fan_in), 1/sqrt(fan_in))
    bound = 1.0 / math.sqrt(fan_in)
    return jax.random.uniform(key, (1, fan_out), jnp.float32, -bound, bound)


def init_params(key, dim_obs, dim_action):
    gain = math.sqrt(2.0 / (1.0 + 0.01 ** 2))  # calculate_gain('leaky_relu')
    ks = jax.random.split(key, 6)
    w1 = xavier_uniform(ks[0], dim_obs, 64, gain)
    b1 = linear_bias(ks[1], dim_obs, 64)
    w2 = xavier_uniform(ks[2], 64, 64, gain)
    b2 = linear_bias(ks[3], 64, 64)
    w3 = xavier_uniform(ks[4], 64, dim_action, gain)
    b3 = linear_bias(ks[5], 64, dim_action)
    return (w1, b1, w2, b2, w3, b3)


def reference_forward_f32(x, params):
    w1, b1, w2, b2, w3, b3 = params
    h1 = _leaky_relu(x @ w1 + b1)
    h2 = _leaky_relu(h1 @ w2 + b2)
    return h2 @ w3 + b3


def reference_forward_bf16(x, params):
    # Mirrors the kernel's numerics: bf16 matmul inputs, f32 accumulation/elementwise.
    w1, b1, w2, b2, w3, b3 = params
    bf, f32 = jnp.bfloat16, jnp.float32
    h1 = _leaky_relu(jnp.dot(x.astype(bf), w1.astype(bf), preferred_element_type=f32) + b1)
    h2 = _leaky_relu(jnp.dot(h1.astype(bf), w2.astype(bf), preferred_element_type=f32) + b2)
    return jnp.dot(h2.astype(bf), w3.astype(bf), preferred_element_type=f32) + b3


if __name__ == "__main__":
    dim_obs, dim_action = 32, 8
    key = jax.random.PRNGKey(0)
    k_params, k_x1, k_x2, k_x3 = jax.random.split(key, 4)

    params = init_params(k_params, dim_obs, dim_action)
    prepared = prepare_params(params)   # bf16 weight cast happens once, here

    # Case 1: tiny acting batch (single full-dim tile path).
    batch = 8
    x = jax.random.normal(k_x1, (batch, dim_obs), jnp.float32)
    out = dqn_mlp_forward(x, prepared)
    jax.block_until_ready(out)
    assert out.shape == (batch, dim_action)
    assert jnp.allclose(out, reference_forward_bf16(x, params), atol=1e-3, rtol=1e-3), \
        "mismatch vs bf16 reference (small batch)"
    assert jnp.allclose(out, reference_forward_f32(x, params), atol=1e-1, rtol=5e-2), \
        "mismatch vs f32 reference (small batch)"

    # Case 2: multi-tile grid with a ragged last tile (200 = 3*64 + 8), no wrapper pad.
    batch2 = 200
    x2 = jax.random.normal(k_x2, (batch2, dim_obs), jnp.float32)
    out2 = dqn_mlp_forward(x2, prepared, block_batch=64)   # grid of 4 tiles
    jax.block_until_ready(out2)
    assert out2.shape == (batch2, dim_action)
    assert jnp.allclose(out2, reference_forward_bf16(x2, params), atol=1e-3, rtol=1e-3), \
        "mismatch vs bf16 reference (tiled batch, ragged last tile)"

    # Case 3: default tiling with a non-multiple-of-8 boundary tile (133 -> 2 tiles of 72).
    batch3 = 133
    x3 = jax.random.normal(k_x3, (batch3, dim_obs), jnp.float32)
    out3 = dqn_mlp_forward(x3, prepared)
    jax.block_until_ready(out3)
    assert out3.shape == (batch3, dim_action)
    assert jnp.allclose(out3, reference_forward_bf16(x3, params), atol=1e-3, rtol=1e-3), \
        "mismatch vs bf16 reference (two-tile ragged batch)"

    print("KERNEL_OK")
</pallas_src>

<mosaic_0001>
module attributes {stable_mosaic.version = 11 : i64} {
  func.func @mlp_kernel(%arg0: i32, %arg1: memref<8x32xf32, #tpu.memory_space<vmem>>, %arg2: memref<32x64xbf16, #tpu.memory_space<vmem>>, %arg3: memref<1x64xf32, #tpu.memory_space<vmem>>, %arg4: memref<64x64xbf16, #tpu.memory_space<vmem>>, %arg5: memref<1x64xf32, #tpu.memory_space<vmem>>, %arg6: memref<64x8xbf16, #tpu.memory_space<vmem>>, %arg7: memref<1x8xf32, #tpu.memory_space<vmem>>, %arg8: memref<8x8xf32, #tpu.memory_space<vmem>>) attributes {dimension_semantics = [#tpu.dimension_semantics<parallel>], iteration_bounds = array<i64: 1>, scalar_prefetch = 0 : i64, scratch_operands = 0 : i64, tpu.core_type = #tpu.core_type<tc>, window_params = [{transform_indices = @transform_0, window_bounds = array<i64: 8, 32>}, {pipeline_mode = #tpu.pipeline_mode<synchronous>, transform_indices = @transform_1, window_bounds = array<i64: 32, 64>}, {pipeline_mode = #tpu.pipeline_mode<synchronous>, transform_indices = @transform_2, window_bounds = array<i64: 1, 64>}, {pipeline_mode = #tpu.pipeline_mode<synchronous>, transform_indices = @transform_3, window_bounds = array<i64: 64, 64>}, {pipeline_mode = #tpu.pipeline_mode<synchronous>, transform_indices = @transform_4, window_bounds = array<i64: 1, 64>}, {pipeline_mode = #tpu.pipeline_mode<synchronous>, transform_indices = @transform_5, window_bounds = array<i64: 64, 8>}, {pipeline_mode = #tpu.pipeline_mode<synchronous>, transform_indices = @transform_6, window_bounds = array<i64: 1, 8>}, {transform_indices = @transform_7, window_bounds = array<i64: 8, 8>}]} {
    %c0 = arith.constant 0 : index
    %c0_0 = arith.constant 0 : index
    %0 = vector.load %arg1[%c0, %c0_0] : memref<8x32xf32, #tpu.memory_space<vmem>>, vector<8x32xf32>
    %1 = arith.truncf %0 : vector<8x32xf32> to vector<8x32xbf16>
    %c0_1 = arith.constant 0 : index
    %c0_2 = arith.constant 0 : index
    %2 = vector.load %arg2[%c0_1, %c0_2] : memref<32x64xbf16, #tpu.memory_space<vmem>>, vector<32x64xbf16>
    %cst = arith.constant dense<0.000000e+00> : vector<8x64xf32>
    %3 = tpu.matmul %1, %2, %cst {dimension_numbers = #tpu.dot_dimension_numbers<[1], [0], [0], [1], [0, 0, 1, 1], [], []>} : vector<8x32xbf16>, vector<32x64xbf16>, vector<8x64xf32> -> vector<8x64xf32>
    %c0_3 = arith.constant 0 : index
    %c0_4 = arith.constant 0 : index
    %4 = vector.load %arg3[%c0_3, %c0_4] : memref<1x64xf32, #tpu.memory_space<vmem>>, vector<1x64xf32>
    %5 = vector.broadcast %4 : vector<1x64xf32> to vector<8x64xf32>
    %6 = arith.addf %3, %5 : vector<8x64xf32>
    %cst_5 = arith.constant 0.000000e+00 : f32
    %7 = vector.broadcast %cst_5 : f32 to vector<8x64xf32>
    %8 = arith.cmpf ogt, %6, %7 : vector<8x64xf32>
    %cst_6 = arith.constant 0.00999999977 : f32
    %9 = vector.broadcast %cst_6 : f32 to vector<8x64xf32>
    %10 = arith.mulf %9, %6 : vector<8x64xf32>
    %11 = arith.select %8, %6, %10 : vector<8x64xi1>, vector<8x64xf32>
    %12 = arith.truncf %11 : vector<8x64xf32> to vector<8x64xbf16>
    %c0_7 = arith.constant 0 : index
    %c0_8 = arith.constant 0 : index
    %13 = vector.load %arg4[%c0_7, %c0_8] : memref<64x64xbf16, #tpu.memory_space<vmem>>, vector<64x64xbf16>
    %cst_9 = arith.constant dense<0.000000e+00> : vector<8x64xf32>
    %14 = tpu.matmul %12, %13, %cst_9 {dimension_numbers = #tpu.dot_dimension_numbers<[1], [0], [0], [1], [0, 0, 1, 1], [], []>} : vector<8x64xbf16>, vector<64x64xbf16>, vector<8x64xf32> -> vector<8x64xf32>
    %c0_10 = arith.constant 0 : index
    %c0_11 = arith.constant 0 : index
    %15 = vector.load %arg5[%c0_10, %c0_11] : memref<1x64xf32, #tpu.memory_space<vmem>>, vector<1x64xf32>
    %16 = vector.broadcast %15 : vector<1x64xf32> to vector<8x64xf32>
    %17 = arith.addf %14, %16 : vector<8x64xf32>
    %cst_12 = arith.constant 0.000000e+00 : f32
    %18 = vector.broadcast %cst_12 : f32 to vector<8x64xf32>
    %19 = arith.cmpf ogt, %17, %18 : vector<8x64xf32>
    %cst_13 = arith.constant 0.00999999977 : f32
    %20 = vector.broadcast %cst_13 : f32 to vector<8x64xf32>
    %21 = arith.mulf %20, %17 : vector<8x64xf32>
    %22 = arith.select %19, %17, %21 : vector<8x64xi1>, vector<8x64xf32>
    %23 = arith.truncf %22 : vector<8x64xf32> to vector<8x64xbf16>
    %c0_14 = arith.constant 0 : index
    %c0_15 = arith.constant 0 : index
    %24 = vector.load %arg6[%c0_14, %c0_15] : memref<64x8xbf16, #tpu.memory_space<vmem>>, vector<64x8xbf16>
    %cst_16 = arith.constant dense<0.000000e+00> : vector<8x8xf32>
    %25 = tpu.matmul %23, %24, %cst_16 {dimension_numbers = #tpu.dot_dimension_numbers<[1], [0], [0], [1], [0, 0, 1, 1], [], []>} : vector<8x64xbf16>, vector<64x8xbf16>, vector<8x8xf32> -> vector<8x8xf32>
    %c0_17 = arith.constant 0 : index
    %c0_18 = arith.constant 0 : index
    %26 = vector.load %arg7[%c0_17, %c0_18] : memref<1x8xf32, #tpu.memory_space<vmem>>, vector<1x8xf32>
    %27 = vector.broadcast %26 : vector<1x8xf32> to vector<8x8xf32>
    %28 = arith.addf %25, %27 : vector<8x8xf32>
    %c0_19 = arith.constant 0 : index
    %c0_20 = arith.constant 0 : index
    %29 = vector.load %arg8[%c0_19, %c0_20] : memref<8x8xf32, #tpu.memory_space<vmem>>, vector<8x8xf32>
    tpu.vector_store %arg8[%c0_19, %c0_20], %28 {strides = array<i32>} : memref<8x8xf32, #tpu.memory_space<vmem>>, vector<8x8xf32>,
    return
  }
  func.func @transform_0(%arg0: i32) -> (i32, i32) {
    %c0_i32 = arith.constant 0 : i32
    %c0_i32_0 = arith.constant 0 : i32
    return %arg0, %c0_i32 : i32, i32
  }
  func.func @transform_1(%arg0: i32) -> (i32, i32) {
    %c0_i32 = arith.constant 0 : i32
    %c0_i32_0 = arith.constant 0 : i32
    %c0_i32_1 = arith.constant 0 : i32
    return %c0_i32, %c0_i32_0 : i32, i32
  }
  func.func @transform_2(%arg0: i32) -> (i32, i32) {
    %c0_i32 = arith.constant 0 : i32
    %c0_i32_0 = arith.constant 0 : i32
    %c0_i32_1 = arith.constant 0 : i32
    return %c0_i32, %c0_i32_0 : i32, i32
  }
  func.func @transform_3(%arg0: i32) -> (i32, i32) {
    %c0_i32 = arith.constant 0 : i32
    %c0_i32_0 = arith.constant 0 : i32
    %c0_i32_1 = arith.constant 0 : i32
    return %c0_i32, %c0_i32_0 : i32, i32
  }
  func.func @transform_4(%arg0: i32) -> (i32, i32) {
    %c0_i32 = arith.constant 0 : i32
    %c0_i32_0 = arith.constant 0 : i32
    %c0_i32_1 = arith.constant 0 : i32
    return %c0_i32, %c0_i32_0 : i32, i32
  }
  func.func @transform_5(%arg0: i32) -> (i32, i32) {
    %c0_i32 = arith.constant 0 : i32
    %c0_i32_0 = arith.constant 0 : i32
    %c0_i32_1 = arith.constant 0 : i32
    return %c0_i32, %c0_i32_0 : i32, i32
  }
  func.func @transform_6(%arg0: i32) -> (i32, i32) {
    %c0_i32 = arith.constant 0 : i32
    %c0_i32_0 = arith.constant 0 : i32
    %c0_i32_1 = arith.constant 0 : i32
    return %c0_i32, %c0_i32_0 : i32, i32
  }
  func.func @transform_7(%arg0: i32) -> (i32, i32) {
    %c0_i32 = arith.constant 0 : i32
    %c0_i32_0 = arith.constant 0 : i32
    return %arg0, %c0_i32 : i32, i32
  }
}

</mosaic_0001>

<llo_original>
// kernel: tpu_custom_call.1
$region0: #{tpu_custom_call.1}
  #allocation0 [shape = 'u32[]', space=smem, size = 0x4, offset = 0x4, fixed_abs, tag = 'smem constant byte address 0x4 - core index']
  #allocation1 [shape = 'u32[72,128]{1,0:T(1,128)}', space=vmem, size = 0x9000, scoped, tag = 'internal scratch']
  %s0 = inlined_call_operand.hbm [shape: f32[8,32], index: 0, kind: input, shape index: {}]
  %s1 = inlined_call_operand.hbm [shape: bf16[32,64], index: 1, kind: input, shape index: {}]
  %s2 = inlined_call_operand.vmem [shape: f32[1,64], index: 2, kind: input, shape index: {}]
  %s3 = inlined_call_operand.vmem [shape: bf16[64,64], index: 3, kind: input, shape index: {}]
  %s4 = inlined_call_operand.vmem [shape: f32[1,64], index: 4, kind: input, shape index: {}]
  %s5 = inlined_call_operand.vmem [shape: bf16[64,8], index: 5, kind: input, shape index: {}]
  %s6 = inlined_call_operand.vmem [shape: f32[1,8], index: 6, kind: input, shape index: {}]
  %s7 = inlined_call_operand.hbm [shape: f32[8,8], index: 7, kind: output, shape index: {}]
  %s8 = sld [smem:[#allocation0]]
  $region46: #{tpu_custom_call.1} parent=0
    _
  %s10 = ssub.s32 1, %s8
  %s11 = scalar_select 0, %s10, %s8
  $region1: #{tpu_custom_call.1} parent=0
    #allocation2 [shape = 'u8[4096]{0}', space=vmem, size = 0x1000, scoped, tag = 'input window, operand 0, single buffered']
    #allocation3 [shape = 's32[1]{0}', space=sflag, size = 0x4, scoped, tag = 'scoped memory for tpu_custom_call.1']
    #allocation4 [shape = 's32[1]{0}', space=sflag, size = 0x4, scoped, tag = 'scoped memory for tpu_custom_call.1']
    #allocation5 [shape = 'u8[8192]{0}', space=vmem, size = 0x2000, scoped, tag = 'input window, operand 1, single buffered']
    #allocation6 [shape = 's32[1]{0}', space=sflag, size = 0x4, scoped, tag = 'scoped memory for tpu_custom_call.1']
    #allocation7 [shape = 'u8[4096]{0}', space=vmem, size = 0x1000, scoped, tag = 'output window, operand 0, single buffered']
    %12 = vsyncpa [#allocation3], 0
    %13 = vsyncpa [#allocation6], 0
    %14 = vsyncpa [#allocation4], 0
    // Predicated region
    $region2: #{tpu_custom_call.1} parent=1 // pred_check
      _
    $region3: #{tpu_custom_call.1} parent=1 // pred_check_branch
      %16 = sbr.rel (0) target = $region5
    $region4: #{tpu_custom_call.1} parent=1 // pred_region
      %18 = vsyncadd [#allocation3], 0
      %s20 = sshll.u32 %s0, 4
      %s21 = int_to_ptr.hbm [resolvable:$true] %s20
      %s22 = sshll.u32 [#allocation2], 4
      %s23 = int_to_ptr.vmem [resolvable:$true] %s22
      %25 = dma.hbm_to_vmem [thread:$0]  %s21, 128, %s23, [#allocation3]
    $region5: #{tpu_custom_call.1} parent=1 // pred_fallthru
      _
    // Predicated region
    $region6: #{tpu_custom_call.1} parent=1 // pred_check
      _
    $region7: #{tpu_custom_call.1} parent=1 // pred_check_branch
      %27 = sbr.rel (0) target = $region9
    $region8: #{tpu_custom_call.1} parent=1 // pred_region
      %29 = vsyncadd [#allocation6], 0
      %s30 = sshll.u32 %s1, 4
      %s31 = int_to_ptr.hbm [resolvable:$true] %s30
      %s32 = sshll.u32 [#allocation5], 4
      %s33 = int_to_ptr.vmem [resolvable:$true] %s32
      %38 = dma.hbm_to_vmem [thread:$0]  %s31, 256, %s33, [#allocation6], 64, 64, 4
    $region9: #{tpu_custom_call.1} parent=1 // pred_fallthru
      _
    // Predicated region
    $region10: #{tpu_custom_call.1} parent=1 // pred_check
      _
    $region11: #{tpu_custom_call.1} parent=1 // pred_check_branch
      %40 = sbr.rel (0) target = $region13
    $region12: #{tpu_custom_call.1} parent=1 // pred_region
      _
    $region13: #{tpu_custom_call.1} parent=1 // pred_fallthru
      _
    // Predicated region
    $region14: #{tpu_custom_call.1} parent=1 // pred_check
      _
    $region15: #{tpu_custom_call.1} parent=1 // pred_check_branch
      %42 = sbr.rel (0) target = $region17
    $region16: #{tpu_custom_call.1} parent=1 // pred_region
      _
    $region17: #{tpu_custom_call.1} parent=1 // pred_fallthru
      _
    // Predicated region
    $region18: #{tpu_custom_call.1} parent=1 // pred_check
      _
    $region19: #{tpu_custom_call.1} parent=1 // pred_check_branch
      %44 = sbr.rel (0) target = $region21
    $region20: #{tpu_custom_call.1} parent=1 // pred_region
      _
    $region21: #{tpu_custom_call.1} parent=1 // pred_fallthru
      _
    // Predicated region
    $region22: #{tpu_custom_call.1} parent=1 // pred_check
      _
    $region23: #{tpu_custom_call.1} parent=1 // pred_check_branch
      %46 = sbr.rel (0) target = $region25
    $region24: #{tpu_custom_call.1} parent=1 // pred_region
      _
    $region25: #{tpu_custom_call.1} parent=1 // pred_fallthru
      _
    // Predicated region
    $region26: #{tpu_custom_call.1} parent=1 // pred_check
      _
    $region27: #{tpu_custom_call.1} parent=1 // pred_check_branch
      %48 = sbr.rel (0) target = $region29
    $region28: #{tpu_custom_call.1} parent=1 // pred_region
      _
    $region29: #{tpu_custom_call.1} parent=1 // pred_fallthru
      _
    // Predicated region
    $region30: #{tpu_custom_call.1} parent=1 // pred_check
      _
    $region31: #{tpu_custom_call.1} parent=1 // pred_check_branch
      %50 = sbr.rel (0) target = $region33
    $region32: #{tpu_custom_call.1} parent=1 // pred_region
      %52 = dma.done [#allocation3], 128
    $region33: #{tpu_custom_call.1} parent=1 // pred_fallthru
      _
    // Predicated region
    $region34: #{tpu_custom_call.1} parent=1 // pred_check
      _
    $region35: #{tpu_custom_call.1} parent=1 // pred_check_branch
      %54 = sbr.rel (0) target = $region37
    $region36: #{tpu_custom_call.1} parent=1 // pred_region
      %56 = dma.done [#allocation6], 256
    $region37: #{tpu_custom_call.1} parent=1 // pred_fallthru
      _
    %v58 = vld [vmem:[#allocation2] sm:$0xff]
    %v59 = vpack.c.bf16 %v58, %v58
    %v60 = vld [vmem:[#allocation5] sm:$0xf]
    %v61 = vld [vmem:[#allocation5 + $0x4] sm:$0xf]
    %v62 = vld [vmem:[#allocation5 + $0x8] sm:$0xf]
    %v63 = vld [vmem:[#allocation5 + $0xc] sm:$0xf]
    %v64 = vld [vmem:[%s2] sm:$0x1]
    %v66 = vperm.slane %v64, 0
    %v72 = vunpack.c.l.b16 %v60
    %v73 = vunpack.c.l.b16 %v61
    %v74 = vunpack.c.l.b16 %v62
    %v75 = vunpack.c.l.b16 %v63
    %v76 = vpack.c.b16 %v73, %v72
    %v77 = vpack.c.b16 %v75, %v74
    %vm80 = vcmask 261120
    %v82 = vsel %vm80, %v59, 0
    %84 = vmatpush.bf16.msra.mxu0 0
    %85 = vmatpush.bf16.msra.mxu0 0
    %86 = vmatpush.bf16.msra.mxu0 0
    %87 = vmatpush.bf16.msra.mxu0 0
    %88 = vmatpush.bf16.msra.mxu0 0
    %89 = vmatpush.bf16.msra.mxu0 0
    %90 = vmatpush.bf16.msra.mxu0 %v77
    %91 = vmatpush.bf16.msra.mxu0 %v76
    %92 = vmatmul.bf16.gmra.mxu0 %v82
    %v93 = vpop.f32.mrf.mxu0
    %v94 = vadd.f32 %v66, %v93
    %v95 = vpop.f32.mrf.mxu0
    %96 = vdwg.mxu0
    %vm97 = vcmp.gt.f32.partialorder %v94, 0.0
    %v98 = vmul.f32 %v94, 0.01
    %v99 = vsel %vm97, %v94, %v98
    %v100 = vpack.c.bf16 %v99, %v99
    %v101 = vld [vmem:[%s3] sm:$0xf]
    %v102 = vld [vmem:[%s3 + $0x4] sm:$0xf]
    %v103 = vld [vmem:[%s3 + $0x8] sm:$0xf]
    %v104 = vld [vmem:[%s3 + $0xc] sm:$0xf]
    %v105 = vld [vmem:[%s3 + $0x10] sm:$0xf]
    %v106 = vld [vmem:[%s3 + $0x14] sm:$0xf]
    %v107 = vld [vmem:[%s3 + $0x18] sm:$0xf]
    %v108 = vld [vmem:[%s3 + $0x1c] sm:$0xf]
    %v109 = vld [vmem:[%s4] sm:$0x1]
    %v111 = vperm.slane %v109, 0
    %v121 = vunpack.c.l.b16 %v101
    %v122 = vunpack.c.l.b16 %v102
    %v123 = vunpack.c.l.b16 %v103
    %v124 = vunpack.c.l.b16 %v104
    %v125 = vunpack.c.l.b16 %v105
    %v126 = vunpack.c.l.b16 %v106
    %v127 = vunpack.c.l.b16 %v107
    %v128 = vunpack.c.l.b16 %v108
    %v129 = vpack.c.b16 %v122, %v121
    %v130 = vpack.c.b16 %v124, %v123
    %v131 = vpack.c.b16 %v126, %v125
    %v132 = vpack.c.b16 %v128, %v127
    %vm137 = vcmask 523264
    %v139 = vsel %vm137, %v100, 0
    %141 = vmatpush.bf16.msra.mxu0 0
    %142 = vmatpush.bf16.msra.mxu0 0
    %143 = vmatpush.bf16.msra.mxu0 0
    %144 = vmatpush.bf16.msra.mxu0 0
    %145 = vmatpush.bf16.msra.mxu0 %v132
    %146 = vmatpush.bf16.msra.mxu0 %v131
    %147 = vmatpush.bf16.msra.mxu0 %v130
    %148 = vmatpush.bf16.msra.mxu0 %v129
    %149 = vmatmul.bf16.gmra.mxu0 %v139
    %v150 = vpop.f32.mrf.mxu0
    %v151 = vadd.f32 %v111, %v150
    %v152 = vpop.f32.mrf.mxu0
    %153 = vdwg.mxu0
    %vm154 = vcmp.gt.f32.partialorder %v151, 0.0
    %v155 = vmul.f32 %v151, 0.01
    %v156 = vsel %vm154, %v151, %v155
    %v157 = vpack.c.bf16 %v156, %v156
    %v158 = vld [vmem:[%s5] sm:$0xf]
    %v159 = vld [vmem:[%s5 + $0x4] sm:$0xf]
    %v160 = vld [vmem:[%s5 + $0x8] sm:$0xf]
    %v161 = vld [vmem:[%s5 + $0xc] sm:$0xf]
    %v162 = vld [vmem:[%s5 + $0x10] sm:$0xf]
    %v163 = vld [vmem:[%s5 + $0x14] sm:$0xf]
    %v164 = vld [vmem:[%s5 + $0x18] sm:$0xf]
    %v165 = vld [vmem:[%s5 + $0x1c] sm:$0xf]
    %v166 = vld [vmem:[%s6] sm:$0x1]
    %v168 = vperm.slane %v166, 0
    %v178 = vunpack.c.l.b16 %v158
    %v179 = vunpack.c.l.b16 %v159
    %v180 = vunpack.c.l.b16 %v160
    %v181 = vunpack.c.l.b16 %v161
    %v182 = vunpack.c.l.b16 %v162
    %v183 = vunpack.c.l.b16 %v163
    %v184 = vunpack.c.l.b16 %v164
    %v185 = vunpack.c.l.b16 %v165
    %v186 = vpack.c.b16 %v179, %v178
    %v187 = vpack.c.b16 %v181, %v180
    %v188 = vpack.c.b16 %v183, %v182
    %v189 = vpack.c.b16 %v185, %v184
    %v195 = vsel %vm137, %v157, 0
    %197 = vmatpush.bf16.msra.mxu0 0
    %198 = vmatpush.bf16.msra.mxu0 0
    %199 = vmatpush.bf16.msra.mxu0 0
    %200 = vmatpush.bf16.msra.mxu0 0
    %201 = vmatpush.bf16.msra.mxu0 %v189
    %202 = vmatpush.bf16.msra.mxu0 %v188
    %203 = vmatpush.bf16.msra.mxu0 %v187
    %204 = vmatpush.bf16.msra.mxu0 %v186
    %205 = vmatmul.bf16.gmra.mxu0 %v195
    %v206 = vpop.f32.mrf.mxu0
    %v207 = vadd.f32 %v168, %v206
    %v208 = vpop.f32.mrf.mxu0
    %209 = vdwg.mxu0
    %vm210 = vcmask 64512
    %211 = vst.msk [vmem:[#allocation7] sm:$0xff] %vm210, %v207
    // Predicated region
    $region38: #{tpu_custom_call.1} parent=1 // pred_check
      _
    $region39: #{tpu_custom_call.1} parent=1 // pred_check_branch
      %213 = sbr.rel (0) target = $region41
    $region40: #{tpu_custom_call.1} parent=1 // pred_region
      %215 = vsyncadd [#allocation4], 0
      %s217 = sshll.u32 [#allocation7], 4
      %s218 = int_to_ptr.vmem [resolvable:$true] %s217
      %s219 = sshll.u32 %s7, 4
      %s220 = int_to_ptr.hbm [resolvable:$true] %s219
      %222 = dma.vmem_to_hbm [thread:$0]  %s218, 128, %s220, [#allocation4]
    $region41: #{tpu_custom_call.1} parent=1 // pred_fallthru
      _
    // Predicated region
    $region42: #{tpu_custom_call.1} parent=1 // pred_check
      _
    $region43: #{tpu_custom_call.1} parent=1 // pred_check_branch
      %224 = sbr.rel (0) target = $region45
    $region44: #{tpu_custom_call.1} parent=1 // pred_region
      %226 = dma.done [#allocation4], 128
    $region45: #{tpu_custom_call.1} parent=1 // pred_fallthru
      _
    %227 = vsyncpa [#allocation3], 1
    %228 = vsyncpa [#allocation6], 1
    %229 = vsyncpa [#allocation4], 1

</llo_original>
